<compile_context>
chip_gen: v7x
topology: tpu7x:2x2x1
jax: 0.10.0
libtpu: 0.0.40
codegen_flags: <defaults>
</compile_context>

<pallas_src>
import math

import jax
import jax.numpy as jnp
from jax.experimental import pallas as pl
from jax.experimental.pallas import tpu as pltpu

_LANES = 128


def _round_up(x, m):
    return ((x + m - 1) // m) * m


def _pick_row_tile(H, max_rows=8):
    """Largest divisor of H that is <= max_rows (keeps per-block VMEM small)."""
    for th in range(min(H, max_rows), 0, -1):
        if H % th == 0:
            return th
    return H


# ---------------------------------------------------------------------------
# Pass 1: conv (3 block-Toeplitz MXU matmuls) + per-tile BN partial sums.
# ---------------------------------------------------------------------------
def _conv_stats_kernel(x_ref, wt_ref, conv_ref, stats_ref):
    # x_ref:     (1, 1, TH+2, (W+2)*Cin)  halo'd row tile, lane-dense rows
    # wt_ref:    (3, (W+2)*Cin, NL)       block-Toeplitz conv weights (resident)
    # conv_ref:  (1, 1, TH, NL)           conv output tile (lane-dense)
    # stats_ref: (1, 1, 2, NL)            per-tile [sum, sum_sq] partials
    TH = conv_ref.shape[2]
    NL = conv_ref.shape[3]
    acc = jnp.zeros((TH, NL), jnp.float32)
    for kh in range(3):  # unrolled at trace time: 3 well-shaped MXU matmuls
        acc = acc + jnp.dot(
            x_ref[0, 0, kh:kh + TH, :], wt_ref[kh],
            preferred_element_type=jnp.float32)
    conv_ref[0, 0] = acc
    stats_ref[0, 0, 0:1, :] = jnp.sum(acc, axis=0, keepdims=True)
    stats_ref[0, 0, 1:2, :] = jnp.sum(acc * acc, axis=0, keepdims=True)


# ---------------------------------------------------------------------------
# Pass 2: fused BN affine (scale/shift precomputed in the wrapper) + ReLU.
# ---------------------------------------------------------------------------
def _bn_relu_kernel(conv_ref, scale_ref, shift_ref, o_ref):
    y = conv_ref[0, 0] * scale_ref[...] + shift_ref[...]
    o_ref[0, 0] = jnp.maximum(y, 0.0)


def conv_block_forward(x_nchw, weight, bias, gamma, beta, eps=1e-5,
                       row_tile=8, mxu_dtype=jnp.float32):
    """ConvBlock forward.

    x_nchw: (N, Cin, H, W) f32;  weight: (Cout, Cin, 3, 3);  bias/gamma/beta: (Cout,)
    returns (N, Cout, H, W) f32.
    mxu_dtype: set to jnp.bfloat16 on v6e/v7x to halve activation/weight footprint and
               use the fast MXU bf16 path (accumulation stays f32); default f32 keeps
               exact PyTorch-f32 semantics.
    """
    N, Cin, H, W = x_nchw.shape
    Cout = weight.shape[0]

    TH = _pick_row_tile(H, row_tile)      # rows per tile
    NT = H // TH                          # row tiles
    Wp = W + 2
    KW = Wp * Cin                         # matmul K  (lane width of input rows)
    NL = _round_up(W * Cout, _LANES)      # matmul N  (lane width of output rows)

    # ---- layout prep: one cheap XLA pass over the (small) input ------------
    # NCHW -> NHWC, pad H/W by 1, flatten each row to (W+2)*Cin lanes, slice
    # overlapping (TH+2)-row windows so every grid block is rectangular (the
    # 2-row halo is duplicated instead of needing overlapping BlockSpecs).
    x_nhwc = jnp.transpose(x_nchw, (0, 2, 3, 1)).astype(jnp.float32)
    x_pad = jnp.pad(x_nhwc, ((0, 0), (1, 1), (1, 1), (0, 0)))
    x_rows = x_pad.reshape(N, H + 2, KW)
    x_win = jnp.stack(
        [x_rows[:, t * TH:t * TH + TH + 2, :] for t in range(NT)],
        axis=1).astype(mxu_dtype)                         # (N, NT, TH+2, KW)

    # ---- block-Toeplitz conv weight ----------------------------------------
    # WT[kh, (j+kw)*Cin + c, j*Cout + o] = weight[o, c, kh, kw]
    w_t = jnp.transpose(weight, (2, 3, 1, 0)).astype(jnp.float32)   # (kh,kw,c,o)
    P = jnp.stack([jnp.eye(W, Wp, k=kw, dtype=jnp.float32) for kw in range(3)])
    M = jnp.einsum('xjw,hxco->hwcjo', P, w_t)             # (3, Wp, Cin, W, Cout)
    WT = M.reshape(3, KW, W * Cout)
    WT = jnp.pad(WT, ((0, 0), (0, 0), (0, NL - W * Cout))).astype(mxu_dtype)

    # Conv bias intentionally dropped: training-mode BatchNorm subtracts the
    # per-channel batch mean, so a per-channel constant bias cancels exactly.
    del bias

    grid = (N, NT)
    cparams = pltpu.CompilerParams(
        dimension_semantics=("parallel", "parallel"),
        vmem_limit_bytes=32 * 1024 * 1024)

    conv_flops = N * NT * 3 * 2 * TH * KW * NL
    conv_bytes = (x_win.size * x_win.dtype.itemsize
                  + WT.size * WT.dtype.itemsize
                  + N * NT * TH * NL * 4 + N * NT * 2 * NL * 4)

    conv_out, stats = pl.pallas_call(
        _conv_stats_kernel,
        grid=grid,
        in_specs=[
            pl.BlockSpec((1, 1, TH + 2, KW), lambda n, t: (n, t, 0, 0)),
            pl.BlockSpec((3, KW, NL), lambda n, t: (0, 0, 0)),   # fetched once
        ],
        out_specs=(
            pl.BlockSpec((1, 1, TH, NL), lambda n, t: (n, t, 0, 0)),
            pl.BlockSpec((1, 1, 2, NL), lambda n, t: (n, t, 0, 0)),
        ),
        out_shape=(
            jax.ShapeDtypeStruct((N, NT, TH, NL), jnp.float32),
            jax.ShapeDtypeStruct((N, NT, 2, NL), jnp.float32),
        ),
        compiler_params=cparams,
        cost_estimate=pl.CostEstimate(flops=conv_flops, transcendentals=0,
                                      bytes_accessed=conv_bytes),
    )(x_win, WT)

    # ---- fold BN batch statistics into per-lane scale/shift (tiny XLA ops) --
    count = N * H * W
    tot = stats.sum(axis=(0, 1))[:, :W * Cout].reshape(2, W, Cout).sum(axis=1)
    mean = tot[0] / count
    var = jnp.maximum(tot[1] / count - mean * mean, 0.0)    # biased var (training BN)
    scale = gamma.astype(jnp.float32) * jax.lax.rsqrt(var + eps)
    shift = beta.astype(jnp.float32) - mean * scale
    scale_l = jnp.pad(jnp.tile(scale, W), (0, NL - W * Cout)).reshape(1, NL)
    shift_l = jnp.pad(jnp.tile(shift, W), (0, NL - W * Cout)).reshape(1, NL)

    bn_bytes = 2 * N * NT * TH * NL * 4 + 2 * NL * 4
    y = pl.pallas_call(
        _bn_relu_kernel,
        grid=grid,
        in_specs=[
            pl.BlockSpec((1, 1, TH, NL), lambda n, t: (n, t, 0, 0)),
            pl.BlockSpec((1, NL), lambda n, t: (0, 0)),
            pl.BlockSpec((1, NL), lambda n, t: (0, 0)),
        ],
        out_specs=pl.BlockSpec((1, 1, TH, NL), lambda n, t: (n, t, 0, 0)),
        out_shape=jax.ShapeDtypeStruct((N, NT, TH, NL), jnp.float32),
        compiler_params=cparams,
        cost_estimate=pl.CostEstimate(flops=2 * N * NT * TH * NL,
                                      transcendentals=0,
                                      bytes_accessed=bn_bytes),
    )(conv_out, scale_l, shift_l)

    # ---- back to PyTorch NCHW ------------------------------------------------
    y = y[..., :W * Cout].reshape(N, H, W, Cout)
    return jnp.transpose(y, (0, 3, 1, 2))


if __name__ == "__main__":
    # Small deterministic example consistent with ConvBlock(in=4, out=8).
    N, Cin, Cout, H, W = 2, 4, 8, 16, 16

    key = jax.random.PRNGKey(0)
    kx, kw_, kb, kg, kbe = jax.random.split(key, 5)

    x = jax.random.normal(kx, (N, Cin, H, W), dtype=jnp.float32)
    fan_in = Cin * 3 * 3
    bound = 1.0 / math.sqrt(fan_in)
    weight = jax.random.uniform(kw_, (Cout, Cin, 3, 3), jnp.float32,
                                minval=-bound, maxval=bound)
    bias = jax.random.uniform(kb, (Cout,), jnp.float32,
                              minval=-bound, maxval=bound)
    gamma = jnp.ones((Cout,), jnp.float32) + 0.1 * jax.random.normal(kg, (Cout,))
    beta = 0.1 * jax.random.normal(kbe, (Cout,))

    fwd = jax.jit(conv_block_forward)
    out = jax.block_until_ready(fwd(x, weight, bias, gamma, beta))

    assert out.shape == (N, Cout, H, W)
    assert bool(jnp.all(out >= 0.0))            # ReLU output is non-negative

    # Pure-JAX reference (conv + training-mode BN + ReLU) as a sanity check.
    conv_ref = jax.lax.conv_general_dilated(
        x, weight, window_strides=(1, 1), padding=((1, 1), (1, 1)),
        dimension_numbers=("NCHW", "OIHW", "NCHW"),
        precision=jax.lax.Precision.HIGHEST) + bias[None, :, None, None]
    mu = conv_ref.mean(axis=(0, 2, 3), keepdims=True)
    va = ((conv_ref - mu) ** 2).mean(axis=(0, 2, 3), keepdims=True)
    ref = (conv_ref - mu) * jax.lax.rsqrt(va + 1e-5)
    ref = jnp.maximum(ref * gamma[None, :, None, None] + beta[None, :, None, None], 0.0)
    max_err = float(jnp.max(jnp.abs(out - ref)))
    assert max_err < 5e-2, f"mismatch vs reference: {max_err}"

    print("KERNEL_OK")
</pallas_src>

<mosaic_0001>
module attributes {stable_mosaic.version = 11 : i64} {
  func.func @_conv_stats_kernel(%arg0: i32, %arg1: i32, %arg2: memref<1x1x10x72xf32, #tpu.memory_space<vmem>>, %arg3: memref<3x72x128xf32, #tpu.memory_space<vmem>>, %arg4: memref<1x1x8x128xf32, #tpu.memory_space<vmem>>, %arg5: memref<1x1x2x128xf32, #tpu.memory_space<vmem>>) attributes {dimension_semantics = [#tpu.dimension_semantics<parallel>, #tpu.dimension_semantics<parallel>], iteration_bounds = array<i64: 2, 2>, scalar_prefetch = 0 : i64, scratch_operands = 0 : i64, tpu.core_type = #tpu.core_type<tc>, window_params = [{transform_indices = @transform_0, window_bounds = array<i64: 1, 1, 10, 72>}, {pipeline_mode = #tpu.pipeline_mode<synchronous>, transform_indices = @transform_1, window_bounds = array<i64: 3, 72, 128>}, {transform_indices = @transform_2, window_bounds = array<i64: 1, 1, 8, 128>}, {transform_indices = @transform_3, window_bounds = array<i64: 1, 1, 2, 128>}]} {
    %cst = arith.constant 0.000000e+00 : f32
    %0 = vector.broadcast %cst : f32 to vector<8x128xf32>
    %c0 = arith.constant 0 : index
    %c0_0 = arith.constant 0 : index
    %c0_1 = arith.constant 0 : index
    %c0_2 = arith.constant 0 : index
    %1 = vector.load %arg2[%c0, %c0_0, %c0_1, %c0_2] : memref<1x1x10x72xf32, #tpu.memory_space<vmem>>, vector<1x1x8x72xf32>
    %2 = vector.shape_cast %1 : vector<1x1x8x72xf32> to vector<8x72xf32>
    %c0_3 = arith.constant 0 : index
    %c0_4 = arith.constant 0 : index
    %c0_5 = arith.constant 0 : index
    %3 = vector.load %arg3[%c0_3, %c0_4, %c0_5] : memref<3x72x128xf32, #tpu.memory_space<vmem>>, vector<1x72x128xf32>
    %4 = vector.shape_cast %3 : vector<1x72x128xf32> to vector<72x128xf32>
    %cst_6 = arith.constant dense<0.000000e+00> : vector<8x128xf32>
    %5 = tpu.matmul %2, %4, %cst_6 {dimension_numbers = #tpu.dot_dimension_numbers<[1], [0], [0], [1], [0, 0, 1, 1], [], []>} : vector<8x72xf32>, vector<72x128xf32>, vector<8x128xf32> -> vector<8x128xf32>
    %6 = arith.addf %0, %5 : vector<8x128xf32>
    %c0_7 = arith.constant 0 : index
    %c0_8 = arith.constant 0 : index
    %c1 = arith.constant 1 : index
    %c0_9 = arith.constant 0 : index
    %7 = vector.load %arg2[%c0_7, %c0_8, %c1, %c0_9] : memref<1x1x10x72xf32, #tpu.memory_space<vmem>>, vector<1x1x8x72xf32>
    %8 = vector.shape_cast %7 : vector<1x1x8x72xf32> to vector<8x72xf32>
    %c1_10 = arith.constant 1 : index
    %c0_11 = arith.constant 0 : index
    %c0_12 = arith.constant 0 : index
    %9 = vector.load %arg3[%c1_10, %c0_11, %c0_12] : memref<3x72x128xf32, #tpu.memory_space<vmem>>, vector<1x72x128xf32>
    %10 = vector.shape_cast %9 : vector<1x72x128xf32> to vector<72x128xf32>
    %cst_13 = arith.constant dense<0.000000e+00> : vector<8x128xf32>
    %11 = tpu.matmul %8, %10, %cst_13 {dimension_numbers = #tpu.dot_dimension_numbers<[1], [0], [0], [1], [0, 0, 1, 1], [], []>} : vector<8x72xf32>, vector<72x128xf32>, vector<8x128xf32> -> vector<8x128xf32>
    %12 = arith.addf %6, %11 : vector<8x128xf32>
    %c0_14 = arith.constant 0 : index
    %c0_15 = arith.constant 0 : index
    %c2 = arith.constant 2 : index
    %c0_16 = arith.constant 0 : index
    %13 = vector.load %arg2[%c0_14, %c0_15, %c2, %c0_16] : memref<1x1x10x72xf32, #tpu.memory_space<vmem>>, vector<1x1x8x72xf32>
    %14 = vector.shape_cast %13 : vector<1x1x8x72xf32> to vector<8x72xf32>
    %c2_17 = arith.constant 2 : index
    %c0_18 = arith.constant 0 : index
    %c0_19 = arith.constant 0 : index
    %15 = vector.load %arg3[%c2_17, %c0_18, %c0_19] : memref<3x72x128xf32, #tpu.memory_space<vmem>>, vector<1x72x128xf32>
    %16 = vector.shape_cast %15 : vector<1x72x128xf32> to vector<72x128xf32>
    %cst_20 = arith.constant dense<0.000000e+00> : vector<8x128xf32>
    %17 = tpu.matmul %14, %16, %cst_20 {dimension_numbers = #tpu.dot_dimension_numbers<[1], [0], [0], [1], [0, 0, 1, 1], [], []>} : vector<8x72xf32>, vector<72x128xf32>, vector<8x128xf32> -> vector<8x128xf32>
    %18 = arith.addf %12, %17 : vector<8x128xf32>
    %c0_21 = arith.constant 0 : index
    %c0_22 = arith.constant 0 : index
    %c0_23 = arith.constant 0 : index
    %c0_24 = arith.constant 0 : index
    %19 = vector.load %arg4[%c0_21, %c0_22, %c0_23, %c0_24] : memref<1x1x8x128xf32, #tpu.memory_space<vmem>>, vector<1x1x8x128xf32>
    %20 = vector.shape_cast %19 : vector<1x1x8x128xf32> to vector<8x128xf32>
    %21 = vector.shape_cast %18 : vector<8x128xf32> to vector<1x1x8x128xf32>
    tpu.vector_store %arg4[%c0_21, %c0_22, %c0_23, %c0_24], %21 {strides = array<i32>} : memref<1x1x8x128xf32, #tpu.memory_space<vmem>>, vector<1x1x8x128xf32>,
    %cst_25 = arith.constant dense<0.000000e+00> : vector<128xf32>
    %22 = vector.multi_reduction <add>, %18, %cst_25 [0] : vector<8x128xf32> to vector<128xf32>
    %23 = vector.shape_cast %22 : vector<128xf32> to vector<1x128xf32>
    %c0_26 = arith.constant 0 : index
    %c0_27 = arith.constant 0 : index
    %c0_28 = arith.constant 0 : index
    %c0_29 = arith.constant 0 : index
    %24 = vector.load %arg5[%c0_26, %c0_27, %c0_28, %c0_29] : memref<1x1x2x128xf32, #tpu.memory_space<vmem>>, vector<1x1x1x128xf32>
    %25 = vector.shape_cast %24 : vector<1x1x1x128xf32> to vector<1x128xf32>
    %26 = vector.shape_cast %23 : vector<1x128xf32> to vector<1x1x1x128xf32>
    tpu.vector_store %arg5[%c0_26, %c0_27, %c0_28, %c0_29], %26 {strides = array<i32>} : memref<1x1x2x128xf32, #tpu.memory_space<vmem>>, vector<1x1x1x128xf32>,
    %27 = arith.mulf %18, %18 : vector<8x128xf32>
    %cst_30 = arith.constant dense<0.000000e+00> : vector<128xf32>
    %28 = vector.multi_reduction <add>, %27, %cst_30 [0] : vector<8x128xf32> to vector<128xf32>
    %29 = vector.shape_cast %28 : vector<128xf32> to vector<1x128xf32>
    %c0_31 = arith.constant 0 : index
    %c0_32 = arith.constant 0 : index
    %c1_33 = arith.constant 1 : index
    %c0_34 = arith.constant 0 : index
    %30 = vector.load %arg5[%c0_31, %c0_32, %c1_33, %c0_34] : memref<1x1x2x128xf32, #tpu.memory_space<vmem>>, vector<1x1x1x128xf32>
    %31 = vector.shape_cast %30 : vector<1x1x1x128xf32> to vector<1x128xf32>
    %32 = vector.shape_cast %29 : vector<1x128xf32> to vector<1x1x1x128xf32>
    tpu.vector_store %arg5[%c0_31, %c0_32, %c1_33, %c0_34], %32 {strides = array<i32>} : memref<1x1x2x128xf32, #tpu.memory_space<vmem>>, vector<1x1x1x128xf32>,
    return
  }
  func.func @transform_0(%arg0: i32, %arg1: i32) -> (i32, i32, i32, i32) {
    %c0_i32 = arith.constant 0 : i32
    %c0_i32_0 = arith.constant 0 : i32
    %c0_i32_1 = arith.constant 0 : i32
    return %arg0, %arg1, %c0_i32, %c0_i32_0 : i32, i32, i32, i32
  }
  func.func @transform_1(%arg0: i32, %arg1: i32) -> (i32, i32, i32) {
    %c0_i32 = arith.constant 0 : i32
    %c0_i32_0 = arith.constant 0 : i32
    %c0_i32_1 = arith.constant 0 : i32
    %c0_i32_2 = arith.constant 0 : i32
    return %c0_i32, %c0_i32_0, %c0_i32_1 : i32, i32, i32
  }
  func.func @transform_2(%arg0: i32, %arg1: i32) -> (i32, i32, i32, i32) {
    %c0_i32 = arith.constant 0 : i32
    %c0_i32_0 = arith.constant 0 : i32
    %c0_i32_1 = arith.constant 0 : i32
    return %arg0, %arg1, %c0_i32, %c0_i32_0 : i32, i32, i32, i32
  }
  func.func @transform_3(%arg0: i32, %arg1: i32) -> (i32, i32, i32, i32) {
    %c0_i32 = arith.constant 0 : i32
    %c0_i32_0 = arith.constant 0 : i32
    %c0_i32_1 = arith.constant 0 : i32
    return %arg0, %arg1, %c0_i32, %c0_i32_0 : i32, i32, i32, i32
  }
}

module attributes {stable_mosaic.version = 11 : i64} {
  func.func @_bn_relu_kernel(%arg0: i32, %arg1: i32, %arg2: memref<1x1x8x128xf32, #tpu.memory_space<vmem>>, %arg3: memref<1x128xf32, #tpu.memory_space<vmem>>, %arg4: memref<1x128xf32, #tpu.memory_space<vmem>>, %arg5: memref<1x1x8x128xf32, #tpu.memory_space<vmem>>) attributes {dimension_semantics = [#tpu.dimension_semantics<parallel>, #tpu.dimension_semantics<parallel>], iteration_bounds = array<i64: 2, 2>, scalar_prefetch = 0 : i64, scratch_operands = 0 : i64, tpu.core_type = #tpu.core_type<tc>, window_params = [{transform_indices = @transform_0, window_bounds = array<i64: 1, 1, 8, 128>}, {pipeline_mode = #tpu.pipeline_mode<synchronous>, transform_indices = @transform_1, window_bounds = array<i64: 1, 128>}, {pipeline_mode = #tpu.pipeline_mode<synchronous>, transform_indices = @transform_2, window_bounds = array<i64: 1, 128>}, {transform_indices = @transform_3, window_bounds = array<i64: 1, 1, 8, 128>}]} {
    %c0 = arith.constant 0 : index
    %c0_0 = arith.constant 0 : index
    %c0_1 = arith.constant 0 : index
    %c0_2 = arith.constant 0 : index
    %0 = vector.load %arg2[%c0, %c0_0, %c0_1, %c0_2] : memref<1x1x8x128xf32, #tpu.memory_space<vmem>>, vector<1x1x8x128xf32>
    %1 = vector.shape_cast %0 : vector<1x1x8x128xf32> to vector<8x128xf32>
    %c0_3 = arith.constant 0 : index
    %c0_4 = arith.constant 0 : index
    %2 = vector.load %arg3[%c0_3, %c0_4] : memref<1x128xf32, #tpu.memory_space<vmem>>, vector<1x128xf32>
    %3 = vector.broadcast %2 : vector<1x128xf32> to vector<8x128xf32>
    %4 = arith.mulf %1, %3 : vector<8x128xf32>
    %c0_5 = arith.constant 0 : index
    %c0_6 = arith.constant 0 : index
    %5 = vector.load %arg4[%c0_5, %c0_6] : memref<1x128xf32, #tpu.memory_space<vmem>>, vector<1x128xf32>
    %6 = vector.broadcast %5 : vector<1x128xf32> to vector<8x128xf32>
    %7 = arith.addf %4, %6 : vector<8x128xf32>
    %cst = arith.constant 0.000000e+00 : f32
    %8 = vector.broadcast %cst : f32 to vector<8x128xf32>
    %9 = arith.maximumf %7, %8 : vector<8x128xf32>
    %c0_7 = arith.constant 0 : index
    %c0_8 = arith.constant 0 : index
    %c0_9 = arith.constant 0 : index
    %c0_10 = arith.constant 0 : index
    %10 = vector.load %arg5[%c0_7, %c0_8, %c0_9, %c0_10] : memref<1x1x8x128xf32, #tpu.memory_space<vmem>>, vector<1x1x8x128xf32>
    %11 = vector.shape_cast %10 : vector<1x1x8x128xf32> to vector<8x128xf32>
    %12 = vector.shape_cast %9 : vector<8x128xf32> to vector<1x1x8x128xf32>
    tpu.vector_store %arg5[%c0_7, %c0_8, %c0_9, %c0_10], %12 {strides = array<i32>} : memref<1x1x8x128xf32, #tpu.memory_space<vmem>>, vector<1x1x8x128xf32>,
    return
  }
  func.func @transform_0(%arg0: i32, %arg1: i32) -> (i32, i32, i32, i32) {
    %c0_i32 = arith.constant 0 : i32
    %c0_i32_0 = arith.constant 0 : i32
    %c0_i32_1 = arith.constant 0 : i32
    return %arg0, %arg1, %c0_i32, %c0_i32_0 : i32, i32, i32, i32
  }
  func.func @transform_1(%arg0: i32, %arg1: i32) -> (i32, i32) {
    %c0_i32 = arith.constant 0 : i32
    %c0_i32_0 = arith.constant 0 : i32
    %c0_i32_1 = arith.constant 0 : i32
    return %c0_i32, %c0_i32_0 : i32, i32
  }
  func.func @transform_2(%arg0: i32, %arg1: i32) -> (i32, i32) {
    %c0_i32 = arith.constant 0 : i32
    %c0_i32_0 = arith.constant 0 : i32
    %c0_i32_1 = arith.constant 0 : i32
    return %c0_i32, %c0_i32_0 : i32, i32
  }
  func.func @transform_3(%arg0: i32, %arg1: i32) -> (i32, i32, i32, i32) {
    %c0_i32 = arith.constant 0 : i32
    %c0_i32_0 = arith.constant 0 : i32
    %c0_i32_1 = arith.constant 0 : i32
    return %arg0, %arg1, %c0_i32, %c0_i32_0 : i32, i32, i32, i32
  }
}

</mosaic_0001>

<llo_original>
// kernel: tile.18
$region0: #{tile.18}
  #allocation0 [shape = 's32[1]{0}', space=sflag, size = 0x4, scoped, tag = 'scoped memory for tile.18']
  %s0 = inlined_call_operand.vmem [shape: f32[8], index: 0, kind: input, shape index: {}]
  %s1 = inlined_call_operand.vmem [shape: f32[16,8], index: 1, kind: output, shape index: {}]
  // Predicated region
  $region2: #{tile.18} parent=0 // pred_check
    _
  $region3: #{tile.18} parent=0 // pred_check_branch
    %3 = sbr.rel (0) target = $region5
  $region4: #{tile.18} parent=0 // pred_region
    _
  $region5: #{tile.18} parent=0 // pred_fallthru
    _
  %v4 = vld [vmem:[%s0] ss:$0 sm:$0xff]
  %5 = vst [vmem:[%s1] sm:$0xff] %v4
  %s6 = scalar_lea.vmem %s1, 8
  %7 = vst [vmem:[%s6] sm:$0xff] %v4

// kernel: conv_block_forward.3
$region0: #{conv_block_forward.3}
  #allocation0 [shape = 'u32[]', space=smem, size = 0x4, offset = 0x4, fixed_abs, tag = 'smem constant byte address 0x4 - core index']
  #allocation1 [shape = 'u32[144,128]{1,0:T(1,128)}', space=vmem, size = 0x12000, scoped, tag = 'internal scratch']
  %s0 = inlined_call_operand.vmem [shape: f32[2,2,8,128], index: 0, kind: input, shape index: {}]
  %s1 = inlined_call_operand.vmem [shape: f32[1,128], index: 1, kind: input, shape index: {}]
  %s2 = inlined_call_operand.vmem [shape: f32[1,128], index: 2, kind: input, shape index: {}]
  %s3 = inlined_call_operand.vmem [shape: f32[2,2,8,128], index: 3, kind: output, shape index: {}]
  %s4 = sld [smem:[#allocation0]]
  $region45: #{conv_block_forward.3} parent=0
    _
  %s6 = ssub.s32 1, %s4
  %s7 = scalar_select 0, %s6, %s4
  loop: start=0, step=1, limit=6
  $region2: #{conv_block_forward.3} parent=0 // loop_pre_header
    _
  $region3: #{conv_block_forward.3} parent=0 // loop_header
    %s9 = sphi 0, %s13
    %p10 = scmp.ge.s32.totalorder %s9, 6
    %s16 = sphi 0, %s28
    %s17 = sphi 0, %s24
    %s18 = sphi 0, %s16
    %s19 = sphi 0, %s17
    %s20 = sphi 0, %s18
    %s21 = sphi 0, %s19
    %s33 = sphi 0, %s35
    %s36 = sphi 0, %s33
    %s37 = sphi 0, %s36
    %s53 = sphi 0, %s37
    %s57 = sphi 0, %s57
    %s59 = sphi 0, %s57
    %s60 = sphi 0, %s59
    %s74 = sphi 0, %s60
    %s78 = sphi 0, %s78
    %s80 = sphi 0, %s78
    %s81 = sphi 0, %s80
    %s95 = sphi 0, %s81
    %s103 = sphi 0, %s105
    %s106 = sphi 0, %s103
    %s107 = sphi 0, %s106
    %s123 = sphi 0, %s107
  $region4: #{conv_block_forward.3} parent=0 // loop_header_branch
    %12 = sbr.rel (%p10) target = $region8
  $region5: #{conv_block_forward.3} parent=0 // loop_body
    %s14 = ssub.s32 %s9, 1
    %s15 = ssub.s32 %s9, 2
    %s22 = sadd.s32 1, %s17
    %p23 = scmp.ge.s32.totalorder %s22, 2
    %s24 = scalar_select %p23, 0, %s22
    %s25 = sadd.s32 1, %s16
    %s26 = scalar_select %p23, %s25, %s16
    %p27 = scmp.ge.s32.totalorder %s26, 2
    %s28 = scalar_select %p27, 0, %s26
    %s29 = ssub.s32 %s16, %s28
    %s30 = ssub.s32 %s17, %s24
    %s31 = sor.u32 %s29, %s30
    %p32 = scmp.eq.s32.totalorder %s31, 0
    %s34 = sadd.s32 %s33, 1
    %s35 = scalar_select %p32, %s33, %s34
    %p38 = pneg %p32
    %p39 = scmp.eq.s32.totalorder %s9, 3
    %p40 = por %p38, %p39
    %p41 = scmp.ne.s32.totalorder %s33, %s36
    %p42 = scmp.eq.s32.totalorder %s9, 0
    %p43 = por %p41, %p42
    %p44 = scmp.ne.s32.totalorder %s33, %s36
    %p45 = scmp.eq.s32.totalorder %s14, 3
    %p46 = por %p44, %p45
    %p47 = scmp.ne.s32.totalorder %s36, %s37
    %p48 = scmp.eq.s32.totalorder %s14, 0
    %p49 = por %p47, %p48
    %p50 = scmp.ne.s32.totalorder %s36, %s37
    %p51 = scmp.eq.s32.totalorder %s15, 3
    %p52 = por %p50, %p51
    %p54 = scmp.ne.s32.totalorder %s37, %s53
    %p55 = scmp.eq.s32.totalorder %s15, 0
    %p56 = por %p54, %p55
    %s58 = sadd.s32 %s57, 1
    %p61 = scmp.eq.s32.totalorder %s9, 3
    %p62 = scmp.ne.s32.totalorder %s57, %s59
    %p63 = scmp.eq.s32.totalorder %s9, 0
    %p64 = por %p62, %p63
    %p65 = scmp.ne.s32.totalorder %s57, %s59
    %p66 = scmp.eq.s32.totalorder %s14, 3
    %p67 = por %p65, %p66
    %p68 = scmp.ne.s32.totalorder %s59, %s60
    %p69 = scmp.eq.s32.totalorder %s14, 0
    %p70 = por %p68, %p69
    %p71 = scmp.ne.s32.totalorder %s59, %s60
    %p72 = scmp.eq.s32.totalorder %s15, 3
    %p73 = por %p71, %p72
    %p75 = scmp.ne.s32.totalorder %s60, %s74
    %p76 = scmp.eq.s32.totalorder %s15, 0
    %p77 = por %p75, %p76
    %s79 = sadd.s32 %s78, 1
    %p82 = scmp.eq.s32.totalorder %s9, 3
    %p83 = scmp.ne.s32.totalorder %s78, %s80
    %p84 = scmp.eq.s32.totalorder %s9, 0
    %p85 = por %p83, %p84
    %p86 = scmp.ne.s32.totalorder %s78, %s80
    %p87 = scmp.eq.s32.totalorder %s14, 3
    %p88 = por %p86, %p87
    %p89 = scmp.ne.s32.totalorder %s80, %s81
    %p90 = scmp.eq.s32.totalorder %s14, 0
    %p91 = por %p89, %p90
    %p92 = scmp.ne.s32.totalorder %s80, %s81
    %p93 = scmp.eq.s32.totalorder %s15, 3
    %p94 = por %p92, %p93
    %p96 = scmp.ne.s32.totalorder %s81, %s95
    %p97 = scmp.eq.s32.totalorder %s15, 0
    %p98 = por %p96, %p97
    %s99 = ssub.s32 %s16, %s28
    %s100 = ssub.s32 %s17, %s24
    %s101 = sor.u32 %s99, %s100
    %p102 = scmp.eq.s32.totalorder %s101, 0
    %s104 = sadd.s32 %s103, 1
    %s105 = scalar_select %p102, %s103, %s104
    %p108 = pneg %p102
    %p109 = scmp.eq.s32.totalorder %s9, 3
    %p110 = por %p108, %p109
    %p111 = scmp.ne.s32.totalorder %s103, %s106
    %p112 = scmp.eq.s32.totalorder %s9, 0
    %p113 = por %p111, %p112
    %p114 = scmp.ne.s32.totalorder %s103, %s106
    %p115 = scmp.eq.s32.totalorder %s14, 3
    %p116 = por %p114, %p115
    %p117 = scmp.ne.s32.totalorder %s106, %s107
    %p118 = scmp.eq.s32.totalorder %s14, 0
    %p119 = por %p117, %p118
    %p120 = scmp.ne.s32.totalorder %s106, %s107
    %p121 = scmp.eq.s32.totalorder %s15, 3
    %p122 = por %p120, %p121
    %p124 = scmp.ne.s32.totalorder %s107, %s123
    %p125 = scmp.eq.s32.totalorder %s15, 0
    %p126 = por %p124, %p125
    %p127 = scmp.le.s32.totalorder 1, %s9
    %p128 = scmp.lt.s32.totalorder %s9, 5
    %p129 = pnand %p127, %p128
    %p130 = pneg %p129
    // Predicated region
    $region9: #{conv_block_forward.3} parent=5 // pred_check
      _
    $region10: #{conv_block_forward.3} parent=5 // pred_check_branch
      %132 = sbr.rel (%p129) target = $region12
    $region11: #{conv_block_forward.3} parent=5 // pred_region
      %s133 = ssub.s32 %s9, 1
      // Predicated region
      $region13: #{conv_block_forward.3} parent=11 // pred_check
        %p134 = pneg %p70
      $region14: #{conv_block_forward.3} parent=11 // pred_check_branch
        %136 = sbr.rel (%p134) target = $region16
      $region15: #{conv_block_forward.3} parent=11 // pred_region
        _
      $region16: #{conv_block_forward.3} parent=11 // pred_fallthru
        _
      // Predicated region
      $region17: #{conv_block_forward.3} parent=11 // pred_check
        %p137 = pneg %p91
      $region18: #{conv_block_forward.3} parent=11 // pred_check_branch
        %139 = sbr.rel (%p137) target = $region20
      $region19: #{conv_block_forward.3} parent=11 // pred_region
        _
      $region20: #{conv_block_forward.3} parent=11 // pred_fallthru
        _
    $region12: #{conv_block_forward.3} parent=5 // pred_fallthru
      _
    %p140 = scmp.lt.s32.totalorder %s9, 4
    // Predicated region
    $region21: #{conv_block_forward.3} parent=5 // pred_check
      %p141 = pneg %p140
    $region22: #{conv_block_forward.3} parent=5 // pred_check_branch
      %143 = sbr.rel (%p141) target = $region24
    $region23: #{conv_block_forward.3} parent=5 // pred_region
      // Predicated region
      $region25: #{conv_block_forward.3} parent=23 // pred_check
        %p144 = pneg %p43
      $region26: #{conv_block_forward.3} parent=23 // pred_check_branch
        %146 = sbr.rel (%p144) target = $region28
      $region27: #{conv_block_forward.3} parent=23 // pred_region
        %p147 = scmp.lt.s32.totalorder %s16, 1
        %s148 = scalar_select %p147, %s16, 1
        %p149 = scmp.lt.s32.totalorder %s17, 1
        %s150 = scalar_select %p149, %s17, 1
        %s151 = smul.addr %s148, 2
        %s152 = sadd.s32 %s150, %s151
        %s153 = smul.addr %s152, 8
        %s154 = scalar_lea.vmem %s0, %s153
      $region28: #{conv_block_forward.3} parent=23 // pred_fallthru
        _
    $region24: #{conv_block_forward.3} parent=5 // pred_fallthru
      _
    %p155 = scmp.le.s32.totalorder 1, %s9
    %p156 = scmp.lt.s32.totalorder %s9, 5
    %p157 = pnand %p155, %p156
    %p158 = pneg %p157
    // Predicated region
    $region29: #{conv_block_forward.3} parent=5 // pred_check
      _
    $region30: #{conv_block_forward.3} parent=5 // pred_check_branch
      %160 = sbr.rel (%p157) target = $region32
    $region31: #{conv_block_forward.3} parent=5 // pred_region
      %s161 = ssub.s32 %s9, 1
      %p162 = scmp.lt.s32.totalorder %s18, 1
      %s163 = scalar_select %p162, %s18, 1
      %p164 = scmp.lt.s32.totalorder %s19, 1
      %s165 = scalar_select %p164, %s19, 1
      %s166 = smul.addr %s163, 2
      %s167 = sadd.s32 %s165, %s166
      %s168 = smul.addr %s167, 8
      %s169 = scalar_lea.vmem %s0, %s168
      %p170 = pneg %p49
      %p171 = pneg %p46
      %p172 = pneg %p70
      %p173 = pneg %p67
      %p174 = pneg %p91
      %p175 = pneg %p88
      %p176 = pneg %p119
      %p177 = pneg %p116
      %p178 = scmp.lt.s32.totalorder %s18, 1
      %s179 = scalar_select %p178, %s18, 1
      %p180 = scmp.lt.s32.totalorder %s19, 1
      %s181 = scalar_select %p180, %s19, 1
      %s182 = smul.addr %s179, 2
      %s183 = sadd.s32 %s181, %s182
      %s184 = smul.addr %s183, 8
      %s185 = scalar_lea.vmem %s3, %s184
      %p186 = scmp.lt.s32.totalorder %s18, 1
      %s187 = scalar_select %p186, %s18, 1
      %p188 = scmp.lt.s32.totalorder %s19, 1
      %s189 = scalar_select %p188, %s19, 1
      %s190 = smul.addr %s187, 2
      %s191 = sadd.s32 %s189, %s190
      %s192 = smul.addr %s191, 8
      %s193 = scalar_lea.vmem %s0, %s192
      %p194 = scmp.lt.s32.totalorder %s18, 1
      %s195 = scalar_select %p194, %s18, 1
      %p196 = scmp.lt.s32.totalorder %s19, 1
      %s197 = scalar_select %p196, %s19, 1
      %s198 = smul.addr %s195, 2
      %s199 = sadd.s32 %s197, %s198
      %s200 = smul.addr %s199, 8
      %s201 = scalar_lea.vmem %s3, %s200
      %v202 = vld [vmem:[%s193] sm:$0xff]
      %v203 = vld [vmem:[%s1] sm:$0x1]
      %v205 = vlaneseq
      %v206 = vshrl.u32 %v205, 7
      %v207 = vsub.s32 0, %v206
      %v208 = vrot.slane %v203, %v207
      %v210 = vmul.f32 %v202, %v208
      %v211 = vld [vmem:[%s2] sm:$0x1]
      %v213 = vlaneseq
      %v214 = vshrl.u32 %v213, 7
      %v215 = vsub.s32 0, %v214
      %v216 = vrot.slane %v211, %v215
      %v218 = vadd.f32 %v210, %v216
      %v219 = vmax.f32 %v218, 0.0
      %220 = vst [vmem:[%s201] sm:$0xff] %v219
      %p221 = scmp.lt.s32.totalorder %s18, 1
      %s222 = scalar_select %p221, %s18, 1
      %p223 = scmp.lt.s32.totalorder %s19, 1
      %s224 = scalar_select %p223, %s19, 1
      %s225 = smul.addr %s222, 2
      %s226 = sadd.s32 %s224, %s225
      %s227 = smul.addr %s226, 8
      %s228 = scalar_lea.vmem %s3, %s227
      // Predicated region
      $region33: #{conv_block_forward.3} parent=31 // pred_check
        %p229 = pneg %p116
      $region34: #{conv_block_forward.3} parent=31 // pred_check_branch
        %231 = sbr.rel (%p229) target = $region36
      $region35: #{conv_block_forward.3} parent=31 // pred_region
        _
      $region36: #{conv_block_forward.3} parent=31 // pred_fallthru
        _
    $region32: #{conv_block_forward.3} parent=5 // pred_fallthru
      _
    %p232 = scmp.le.s32.totalorder 2, %s9
    // Predicated region
    $region37: #{conv_block_forward.3} parent=5 // pred_check
      %p233 = pneg %p232
    $region38: #{conv_block_forward.3} parent=5 // pred_check_branch
      %235 = sbr.rel (%p233) target = $region40
    $region39: #{conv_block_forward.3} parent=5 // pred_region
      %s236 = ssub.s32 %s9, 2
      // Predicated region
      $region41: #{conv_block_forward.3} parent=39 // pred_check
        %p237 = pneg %p122
      $region42: #{conv_block_forward.3} parent=39 // pred_check_branch
        %239 = sbr.rel (%p237) target = $region44
      $region43: #{conv_block_forward.3} parent=39 // pred_region
        %p240 = scmp.lt.s32.totalorder %s20, 1
        %s241 = scalar_select %p240, %s20, 1
        %p242 = scmp.lt.s32.totalorder %s21, 1
        %s243 = scalar_select %p242, %s21, 1
        %s244 = smul.addr %s241, 2
        %s245 = sadd.s32 %s243, %s244
        %s246 = smul.addr %s245, 8
        %s247 = scalar_lea.vmem %s3, %s246
      $region44: #{conv_block_forward.3} parent=39 // pred_fallthru
        _
    $region40: #{conv_block_forward.3} parent=5 // pred_fallthru
      _
  $region6: #{conv_block_forward.3} parent=0 // loop_footer
    %s13 = sadd.s32 1, %s9
  $region7: #{conv_block_forward.3} parent=0 // loop_footer_branch
    %8 = sbr.rel target = $region3
  $region8: #{conv_block_forward.3} parent=0 // loop_exit
    _

// kernel: conv_block_forward.2
$region0: #{conv_block_forward.2}
  #allocation0 [shape = 'u32[]', space=smem, size = 0x4, offset = 0x4, fixed_abs, tag = 'smem constant byte address 0x4 - core index']
  #allocation1 [shape = 'u32[144,128]{1,0:T(1,128)}', space=vmem, size = 0x12000, scoped, tag = 'internal scratch']
  %s0 = inlined_call_operand.vmem [shape: f32[2,2,10,72], index: 0, kind: input, shape index: {}]
  %s1 = inlined_call_operand.vmem [shape: f32[3,72,128], index: 1, kind: input, shape index: {}]
  %s2 = inlined_call_operand.vmem [shape: f32[2,2,8,128], index: 2, kind: output, shape index: {0}]
  %s3 = inlined_call_operand.vmem [shape: f32[2,2,2,128], index: 3, kind: output, shape index: {1}]
  %4 = xla_tuple %s2, %s3
  %s5 = sld [smem:[#allocation0]]
  $region49: #{conv_block_forward.2} parent=0
    _
  %s7 = ssub.s32 1, %s5
  %s8 = scalar_select 0, %s7, %s5
  loop: start=0, step=1, limit=6
  $region2: #{conv_block_forward.2} parent=0 // loop_pre_header
    _
  $region3: #{conv_block_forward.2} parent=0 // loop_header
    %s10 = sphi 0, %s14
    %p11 = scmp.ge.s32.totalorder %s10, 6
    %s17 = sphi 0, %s29
    %s18 = sphi 0, %s25
    %s19 = sphi 0, %s17
    %s20 = sphi 0, %s18
    %s21 = sphi 0, %s19
    %s22 = sphi 0, %s20
    %s34 = sphi 0, %s36
    %s37 = sphi 0, %s34
    %s38 = sphi 0, %s37
    %s54 = sphi 0, %s38
    %s58 = sphi 0, %s58
    %s60 = sphi 0, %s58
    %s61 = sphi 0, %s60
    %s75 = sphi 0, %s61
    %s83 = sphi 0, %s85
    %s86 = sphi 0, %s83
    %s87 = sphi 0, %s86
    %s103 = sphi 0, %s87
    %s111 = sphi 0, %s113
    %s114 = sphi 0, %s111
    %s115 = sphi 0, %s114
    %s131 = sphi 0, %s115
  $region4: #{conv_block_forward.2} parent=0 // loop_header_branch
    %13 = sbr.rel (%p11) target = $region8
  $region5: #{conv_block_forward.2} parent=0 // loop_body
    %s15 = ssub.s32 %s10, 1
    %s16 = ssub.s32 %s10, 2
    %s23 = sadd.s32 1, %s18
    %p24 = scmp.ge.s32.totalorder %s23, 2
    %s25 = scalar_select %p24, 0, %s23
    %s26 = sadd.s32 1, %s17
    %s27 = scalar_select %p24, %s26, %s17
    %p28 = scmp.ge.s32.totalorder %s27, 2
    %s29 = scalar_select %p28, 0, %s27
    %s30 = ssub.s32 %s17, %s29
    %s31 = ssub.s32 %s18, %s25
    %s32 = sor.u32 %s30, %s31
    %p33 = scmp.eq.s32.totalorder %s32, 0
    %s35 = sadd.s32 %s34, 1
    %s36 = scalar_select %p33, %s34, %s35
    %p39 = pneg %p33
    %p40 = scmp.eq.s32.totalorder %s10, 3
    %p41 = por %p39, %p40
    %p42 = scmp.ne.s32.totalorder %s34, %s37
    %p43 = scmp.eq.s32.totalorder %s10, 0
    %p44 = por %p42, %p43
    %p45 = scmp.ne.s32.totalorder %s34, %s37
    %p46 = scmp.eq.s32.totalorder %s15, 3
    %p47 = por %p45, %p46
    %p48 = scmp.ne.s32.totalorder %s37, %s38
    %p49 = scmp.eq.s32.totalorder %s15, 0
    %p50 = por %p48, %p49
    %p51 = scmp.ne.s32.totalorder %s37, %s38
    %p52 = scmp.eq.s32.totalorder %s16, 3
    %p53 = por %p51, %p52
    %p55 = scmp.ne.s32.totalorder %s38, %s54
    %p56 = scmp.eq.s32.totalorder %s16, 0
    %p57 = por %p55, %p56
    %s59 = sadd.s32 %s58, 1
    %p62 = scmp.eq.s32.totalorder %s10, 3
    %p63 = scmp.ne.s32.totalorder %s58, %s60
    %p64 = scmp.eq.s32.totalorder %s10, 0
    %p65 = por %p63, %p64
    %p66 = scmp.ne.s32.totalorder %s58, %s60
    %p67 = scmp.eq.s32.totalorder %s15, 3
    %p68 = por %p66, %p67
    %p69 = scmp.ne.s32.totalorder %s60, %s61
    %p70 = scmp.eq.s32.totalorder %s15, 0
    %p71 = por %p69, %p70
    %p72 = scmp.ne.s32.totalorder %s60, %s61
    %p73 = scmp.eq.s32.totalorder %s16, 3
    %p74 = por %p72, %p73
    %p76 = scmp.ne.s32.totalorder %s61, %s75
    %p77 = scmp.eq.s32.totalorder %s16, 0
    %p78 = por %p76, %p77
    %s79 = ssub.s32 %s17, %s29
    %s80 = ssub.s32 %s18, %s25
    %s81 = sor.u32 %s79, %s80
    %p82 = scmp.eq.s32.totalorder %s81, 0
    %s84 = sadd.s32 %s83, 1
    %s85 = scalar_select %p82, %s83, %s84
    %p88 = pneg %p82
    %p89 = scmp.eq.s32.totalorder %s10, 3
    %p90 = por %p88, %p89
    %p91 = scmp.ne.s32.totalorder %s83, %s86
    %p92 = scmp.eq.s32.totalorder %s10, 0
    %p93 = por %p91, %p92
    %p94 = scmp.ne.s32.totalorder %s83, %s86
    %p95 = scmp.eq.s32.totalorder %s15, 3
    %p96 = por %p94, %p95
    %p97 = scmp.ne.s32.totalorder %s86, %s87
    %p98 = scmp.eq.s32.totalorder %s15, 0
    %p99 = por %p97, %p98
    %p100 = scmp.ne.s32.totalorder %s86, %s87
    %p101 = scmp.eq.s32.totalorder %s16, 3
    %p102 = por %p100, %p101
    %p104 = scmp.ne.s32.totalorder %s87, %s103
    %p105 = scmp.eq.s32.totalorder %s16, 0
    %p106 = por %p104, %p105
    %s107 = ssub.s32 %s17, %s29
    %s108 = ssub.s32 %s18, %s25
    %s109 = sor.u32 %s107, %s108
    %p110 = scmp.eq.s32.totalorder %s109, 0
    %s112 = sadd.s32 %s111, 1
    %s113 = scalar_select %p110, %s111, %s112
    %p116 = pneg %p110
    %p117 = scmp.eq.s32.totalorder %s10, 3
    %p118 = por %p116, %p117
    %p119 = scmp.ne.s32.totalorder %s111, %s114
    %p120 = scmp.eq.s32.totalorder %s10, 0
    %p121 = por %p119, %p120
    %p122 = scmp.ne.s32.totalorder %s111, %s114
    %p123 = scmp.eq.s32.totalorder %s15, 3
    %p124 = por %p122, %p123
    %p125 = scmp.ne.s32.totalorder %s114, %s115
    %p126 = scmp.eq.s32.totalorder %s15, 0
    %p127 = por %p125, %p126
    %p128 = scmp.ne.s32.totalorder %s114, %s115
    %p129 = scmp.eq.s32.totalorder %s16, 3
    %p130 = por %p128, %p129
    %p132 = scmp.ne.s32.totalorder %s115, %s131
    %p133 = scmp.eq.s32.totalorder %s16, 0
    %p134 = por %p132, %p133
    %p135 = scmp.le.s32.totalorder 1, %s10
    %p136 = scmp.lt.s32.totalorder %s10, 5
    %p137 = pnand %p135, %p136
    %p138 = pneg %p137
    // Predicated region
    $region9: #{conv_block_forward.2} parent=5 // pred_check
      _
    $region10: #{conv_block_forward.2} parent=5 // pred_check_branch
      %140 = sbr.rel (%p137) target = $region12
    $region11: #{conv_block_forward.2} parent=5 // pred_region
      %s141 = ssub.s32 %s10, 1
      // Predicated region
      $region13: #{conv_block_forward.2} parent=11 // pred_check
        %p142 = pneg %p71
      $region14: #{conv_block_forward.2} parent=11 // pred_check_branch
        %144 = sbr.rel (%p142) target = $region16
      $region15: #{conv_block_forward.2} parent=11 // pred_region
        _
      $region16: #{conv_block_forward.2} parent=11 // pred_fallthru
        _
    $region12: #{conv_block_forward.2} parent=5 // pred_fallthru
      _
    %p145 = scmp.lt.s32.totalorder %s10, 4
    // Predicated region
    $region17: #{conv_block_forward.2} parent=5 // pred_check
      %p146 = pneg %p145
    $region18: #{conv_block_forward.2} parent=5 // pred_check_branch
      %148 = sbr.rel (%p146) target = $region20
    $region19: #{conv_block_forward.2} parent=5 // pred_region
      // Predicated region
      $region21: #{conv_block_forward.2} parent=19 // pred_check
        %p149 = pneg %p44
      $region22: #{conv_block_forward.2} parent=19 // pred_check_branch
        %151 = sbr.rel (%p149) target = $region24
      $region23: #{conv_block_forward.2} parent=19 // pred_region
        %p152 = scmp.lt.s32.totalorder %s17, 1
        %s153 = scalar_select %p152, %s17, 1
        %p154 = scmp.lt.s32.totalorder %s18, 1
        %s155 = scalar_select %p154, %s18, 1
        %s156 = smul.addr %s155, 2
        %s157 = smul.addr %s153, 4
        %s158 = sadd.s32 %s156, %s157
        %s159 = smul.addr %s158, 8
        %s160 = scalar_lea.vmem %s0, %s159
      $region24: #{conv_block_forward.2} parent=19 // pred_fallthru
        _
    $region20: #{conv_block_forward.2} parent=5 // pred_fallthru
      _
    %p161 = scmp.le.s32.totalorder 1, %s10
    %p162 = scmp.lt.s32.totalorder %s10, 5
    %p163 = pnand %p161, %p162
    %p164 = pneg %p163
    // Predicated region
    $region25: #{conv_block_forward.2} parent=5 // pred_check
      _
    $region26: #{conv_block_forward.2} parent=5 // pred_check_branch
      %166 = sbr.rel (%p163) target = $region28
    $region27: #{conv_block_forward.2} parent=5 // pred_region
      %s167 = ssub.s32 %s10, 1
      %p168 = scmp.lt.s32.totalorder %s19, 1
      %s169 = scalar_select %p168, %s19, 1
      %p170 = scmp.lt.s32.totalorder %s20, 1
      %s171 = scalar_select %p170, %s20, 1
      %s172 = smul.addr %s171, 2
      %s173 = smul.addr %s169, 4
      %s174 = sadd.s32 %s172, %s173
      %s175 = smul.addr %s174, 8
      %s176 = scalar_lea.vmem %s0, %s175
      %p177 = pneg %p50
      %p178 = pneg %p47
      %p179 = pneg %p71
      %p180 = pneg %p68
      %p181 = pneg %p99
      %p182 = pneg %p96
      %p183 = scmp.lt.s32.totalorder %s19, 1
      %s184 = scalar_select %p183, %s19, 1
      %p185 = scmp.lt.s32.totalorder %s20, 1
      %s186 = scalar_select %p185, %s20, 1
      %s187 = smul.addr %s184, 2
      %s188 = sadd.s32 %s186, %s187
      %s189 = smul.addr %s188, 8
      %s190 = scalar_lea.vmem %s2, %s189
      %p191 = pneg %p127
      %p192 = pneg %p124
      %p193 = scmp.lt.s32.totalorder %s19, 1
      %s194 = scalar_select %p193, %s19, 1
      %p195 = scmp.lt.s32.totalorder %s20, 1
      %s196 = scalar_select %p195, %s20, 1
      %s197 = smul.addr %s194, 2
      %s198 = sadd.s32 %s196, %s197
      %s199 = smul.addr %s198, 2
      %s200 = scalar_lea.vmem %s3, %s199
      %p201 = scmp.lt.s32.totalorder %s19, 1
      %s202 = scalar_select %p201, %s19, 1
      %p203 = scmp.lt.s32.totalorder %s20, 1
      %s204 = scalar_select %p203, %s20, 1
      %s205 = smul.addr %s204, 2
      %s206 = smul.addr %s202, 4
      %s207 = sadd.s32 %s205, %s206
      %s208 = smul.addr %s207, 8
      %s209 = scalar_lea.vmem %s0, %s208
      %p210 = scmp.lt.s32.totalorder %s19, 1
      %s211 = scalar_select %p210, %s19, 1
      %p212 = scmp.lt.s32.totalorder %s20, 1
      %s213 = scalar_select %p212, %s20, 1
      %s214 = smul.addr %s211, 2
      %s215 = sadd.s32 %s213, %s214
      %s216 = smul.addr %s215, 8
      %s217 = scalar_lea.vmem %s2, %s216
      %p218 = scmp.lt.s32.totalorder %s19, 1
      %s219 = scalar_select %p218, %s19, 1
      %p220 = scmp.lt.s32.totalorder %s20, 1
      %s221 = scalar_select %p220, %s20, 1
      %s222 = smul.addr %s219, 2
      %s223 = sadd.s32 %s221, %s222
      %s224 = smul.addr %s223, 2
      %s225 = scalar_lea.vmem %s3, %s224
      %v226 = vld [vmem:[%s209] sm:$0xff]
      %v227 = vld [vmem:[%s1] sm:$0xff]
      %v228 = vld [vmem:[%s1 + $0x8] sm:$0xff]
      %v229 = vld [vmem:[%s1 + $0x10] sm:$0xff]
      %v230 = vld [vmem:[%s1 + $0x18] sm:$0xff]
      %v231 = vld [vmem:[%s1 + $0x20] sm:$0xff]
      %v232 = vld [vmem:[%s1 + $0x28] sm:$0xff]
      %v233 = vld [vmem:[%s1 + $0x30] sm:$0xff]
      %v234 = vld [vmem:[%s1 + $0x38] sm:$0xff]
      %v235 = vld [vmem:[%s1 + $0x40] sm:$0xff]
      %v236 = vld [vmem:[%s209 + $0x1] sm:$0xff]
      %s237 = scalar_lea.vmem %s1, 72
      %v238 = vld [vmem:[%s237] sm:$0xff]
      %v239 = vld [vmem:[%s237 + $0x8] sm:$0xff]
      %v240 = vld [vmem:[%s237 + $0x10] sm:$0xff]
      %v241 = vld [vmem:[%s237 + $0x18] sm:$0xff]
      %v242 = vld [vmem:[%s237 + $0x20] sm:$0xff]
      %v243 = vld [vmem:[%s237 + $0x28] sm:$0xff]
      %v244 = vld [vmem:[%s237 + $0x30] sm:$0xff]
      %v245 = vld [vmem:[%s237 + $0x38] sm:$0xff]
      %v246 = vld [vmem:[%s237 + $0x40] sm:$0xff]
      %vm247 = vcmask 588800
      %v249 = vsel %vm247, %v236, 0
      %251 = vmatprep.subr.mxu0 0.0
      %252 = vmatpush1.msra.mxu0 %v238
      %253 = vmatprep.subr.mxu0 0.0
      %254 = vmatpush1.msra.mxu0 %v239
      %255 = vmatprep.subr.mxu0 0.0
      %256 = vmatpush1.msra.mxu0 %v240
      %257 = vmatprep.subr.mxu0 0.0
      %258 = vmatpush1.msra.mxu0 %v241
      %259 = vmatprep.subr.mxu0 0.0
      %260 = vmatpush1.msra.mxu0 %v242
      %261 = vmatprep.subr.mxu0 0.0
      %262 = vmatpush1.msra.mxu0 %v243
      %263 = vmatprep.subr.mxu0 0.0
      %264 = vmatpush1.msra.mxu0 %v244
      %265 = vmatprep.subr.mxu0 0.0
      %266 = vmatpush1.msra.mxu0 %v245
      %267 = vmatprep.subr.mxu0 0.0
      %268 = vmatpush1.msra.mxu0 %v246
      %269 = vmatprep.subr.mxu0 0.0
      %270 = vmatpush1.msra.mxu0 0.0
      %271 = vmatprep.subr.mxu0 0.0
      %272 = vmatpush1.msra.mxu0 0.0
      %273 = vmatprep.subr.mxu0 0.0
      %274 = vmatpush1.msra.mxu0 0.0
      %275 = vmatprep.subr.mxu0 0.0
      %276 = vmatpush1.msra.mxu0 0.0
      %277 = vmatprep.subr.mxu0 0.0
      %278 = vmatpush1.msra.mxu0 0.0
      %279 = vmatprep.subr.mxu0 0.0
      %280 = vmatpush1.msra.mxu0 0.0
      %281 = vmatprep.subr.mxu0 0.0
      %282 = vmatpush1.msra.mxu0 0.0
      %283 = vmatprep.subr.mxu0 0.0
      %284 = vmatpush1.msra.mxu0 0.0
      %285 = vmatprep.subr.mxu0 0.0
      %286 = vmatpush1.msra.mxu0 0.0
      %287 = vmatprep.subr.mxu0 0.0
      %288 = vmatpush1.msra.mxu0 0.0
      %289 = vmatprep.subr.mxu0 0.0
      %290 = vmatpush1.msra.mxu0 0.0
      %291 = vmatprep.subr.mxu0 0.0
      %292 = vmatpush1.msra.mxu0 0.0
      %293 = vmatprep.subr.mxu0 0.0
      %294 = vmatpush1.msra.mxu0 0.0
      %295 = vmatprep.subr.mxu0 0.0
      %296 = vmatpush1.msra.mxu0 0.0
      %297 = vmatprep.subr.mxu0 0.0
      %298 = vmatpush1.msra.mxu0 0.0
      %299 = vmatprep.subr.mxu0 0.0
      %300 = vmatpush1.msra.mxu0 0.0
      %301 = vmatprep.subr.mxu0 0.0
      %302 = vmatpush1.msra.mxu0 0.0
      %303 = vmatprep.subr.mxu0 0.0
      %304 = vmatpush1.msra.mxu0 0.0
      %305 = vmatprep.subr.mxu0 0.0
      %306 = vmatpush1.msra.mxu0 0.0
      %307 = vmatprep.subr.mxu0 0.0
      %308 = vmatpush1.msra.mxu0 0.0
      %309 = vmatprep.subr.mxu0 0.0
      %310 = vmatpush1.msra.mxu0 0.0
      %311 = vmatprep.subr.mxu0 0.0
      %312 = vmatpush1.msra.mxu0 0.0
      %313 = vmatprep.subr.mxu0 0.0
      %314 = vmatpush1.msra.mxu0 0.0
      %315 = vmatprep.mubr.f32.mxu0 0.0
      %316 = vmatmul.mubr.f32.gmra.mrb[0].mxu0 %v249
      %v317 = vpop.f32.mrb[0].mxu0
      %v318 = vadd.f32 0.0, %v317
      %v319 = vpop.f32.mrb[0].mxu0
      %320 = vdwg.mxu0
      %v322 = vsel %vm247, %v226, 0
      %324 = vmatprep.subr.mxu0 0.0
      %325 = vmatpush1.msra.mxu0 %v227
      %326 = vmatprep.subr.mxu0 0.0
      %327 = vmatpush1.msra.mxu0 %v228
      %328 = vmatprep.subr.mxu0 0.0
      %329 = vmatpush1.msra.mxu0 %v229
      %330 = vmatprep.subr.mxu0 0.0
      %331 = vmatpush1.msra.mxu0 %v230
      %332 = vmatprep.subr.mxu0 0.0
      %333 = vmatpush1.msra.mxu0 %v231
      %334 = vmatprep.subr.mxu0 0.0
      %335 = vmatpush1.msra.mxu0 %v232
      %336 = vmatprep.subr.mxu0 0.0
      %337 = vmatpush1.msra.mxu0 %v233
      %338 = vmatprep.subr.mxu0 0.0
      %339 = vmatpush1.msra.mxu0 %v234
      %340 = vmatprep.subr.mxu0 0.0
      %341 = vmatpush1.msra.mxu0 %v235
      %342 = vmatprep.subr.mxu0 0.0
      %343 = vmatpush1.msra.mxu0 0.0
      %344 = vmatprep.subr.mxu0 0.0
      %345 = vmatpush1.msra.mxu0 0.0
      %346 = vmatprep.subr.mxu0 0.0
      %347 = vmatpush1.msra.mxu0 0.0
      %348 = vmatprep.subr.mxu0 0.0
      %349 = vmatpush1.msra.mxu0 0.0
      %350 = vmatprep.subr.mxu0 0.0
      %351 = vmatpush1.msra.mxu0 0.0
      %352 = vmatprep.subr.mxu0 0.0
      %353 = vmatpush1.msra.mxu0 0.0
      %354 = vmatprep.subr.mxu0 0.0
      %355 = vmatpush1.msra.mxu0 0.0
      %356 = vmatprep.subr.mxu0 0.0
      %357 = vmatpush1.msra.mxu0 0.0
      %358 = vmatprep.subr.mxu0 0.0
      %359 = vmatpush1.msra.mxu0 0.0
      %360 = vmatprep.subr.mxu0 0.0
      %361 = vmatpush1.msra.mxu0 0.0
      %362 = vmatprep.subr.mxu0 0.0
      %363 = vmatpush1.msra.mxu0 0.0
      %364 = vmatprep.subr.mxu0 0.0
      %365 = vmatpush1.msra.mxu0 0.0
      %366 = vmatprep.subr.mxu0 0.0
      %367 = vmatpush1.msra.mxu0 0.0
      %368 = vmatprep.subr.mxu0 0.0
      %369 = vmatpush1.msra.mxu0 0.0
      %370 = vmatprep.subr.mxu0 0.0
      %371 = vmatpush1.msra.mxu0 0.0
      %372 = vmatprep.subr.mxu0 0.0
      %373 = vmatpush1.msra.mxu0 0.0
      %374 = vmatprep.subr.mxu0 0.0
      %375 = vmatpush1.msra.mxu0 0.0
      %376 = vmatprep.subr.mxu0 0.0
      %377 = vmatpush1.msra.mxu0 0.0
      %378 = vmatprep.subr.mxu0 0.0
      %379 = vmatpush1.msra.mxu0 0.0
      %380 = vmatprep.subr.mxu0 0.0
      %381 = vmatpush1.msra.mxu0 0.0
      %382 = vmatprep.subr.mxu0 0.0
      %383 = vmatpush1.msra.mxu0 0.0
      %384 = vmatprep.subr.mxu0 0.0
      %385 = vmatpush1.msra.mxu0 0.0
      %386 = vmatprep.subr.mxu0 0.0
      %387 = vmatpush1.msra.mxu0 0.0
      %388 = vmatprep.mubr.f32.mxu0 0.0
      %389 = vmatmul.mubr.f32.gmra.mrb[0].mxu0 %v322
      %v390 = vpop.f32.mrb[0].mxu0
      %v391 = vadd.f32 %v318, %v390
      %v392 = vpop.f32.mrb[0].mxu0
      %393 = vdwg.mxu0
      %v394 = vld [vmem:[%s209 + $0x2] sm:$0xff]
      %s395 = scalar_lea.vmem %s1, 144
      %v396 = vld [vmem:[%s395] sm:$0xff]
      %v397 = vld [vmem:[%s395 + $0x8] sm:$0xff]
      %v398 = vld [vmem:[%s395 + $0x10] sm:$0xff]
      %v399 = vld [vmem:[%s395 + $0x18] sm:$0xff]
      %v400 = vld [vmem:[%s395 + $0x20] sm:$0xff]
      %v401 = vld [vmem:[%s395 + $0x28] sm:$0xff]
      %v402 = vld [vmem:[%s395 + $0x30] sm:$0xff]
      %v403 = vld [vmem:[%s395 + $0x38] sm:$0xff]
      %v404 = vld [vmem:[%s395 + $0x40] sm:$0xff]
      %v406 = vsel %vm247, %v394, 0
      %408 = vmatprep.subr.mxu0 0.0
      %409 = vmatpush1.msra.mxu0 %v396
      %410 = vmatprep.subr.mxu0 0.0
      %411 = vmatpush1.msra.mxu0 %v397
      %412 = vmatprep.subr.mxu0 0.0
      %413 = vmatpush1.msra.mxu0 %v398
      %414 = vmatprep.subr.mxu0 0.0
      %415 = vmatpush1.msra.mxu0 %v399
      %416 = vmatprep.subr.mxu0 0.0
      %417 = vmatpush1.msra.mxu0 %v400
      %418 = vmatprep.subr.mxu0 0.0
      %419 = vmatpush1.msra.mxu0 %v401
      %420 = vmatprep.subr.mxu0 0.0
      %421 = vmatpush1.msra.mxu0 %v402
      %422 = vmatprep.subr.mxu0 0.0
      %423 = vmatpush1.msra.mxu0 %v403
      %424 = vmatprep.subr.mxu0 0.0
      %425 = vmatpush1.msra.mxu0 %v404
      %426 = vmatprep.subr.mxu0 0.0
      %427 = vmatpush1.msra.mxu0 0.0
      %428 = vmatprep.subr.mxu0 0.0
      %429 = vmatpush1.msra.mxu0 0.0
      %430 = vmatprep.subr.mxu0 0.0
      %431 = vmatpush1.msra.mxu0 0.0
      %432 = vmatprep.subr.mxu0 0.0
      %433 = vmatpush1.msra.mxu0 0.0
      %434 = vmatprep.subr.mxu0 0.0
      %435 = vmatpush1.msra.mxu0 0.0
      %436 = vmatprep.subr.mxu0 0.0
      %437 = vmatpush1.msra.mxu0 0.0
      %438 = vmatprep.subr.mxu0 0.0
      %439 = vmatpush1.msra.mxu0 0.0
      %440 = vmatprep.subr.mxu0 0.0
      %441 = vmatpush1.msra.mxu0 0.0
      %442 = vmatprep.subr.mxu0 0.0
      %443 = vmatpush1.msra.mxu0 0.0
      %444 = vmatprep.subr.mxu0 0.0
      %445 = vmatpush1.msra.mxu0 0.0
      %446 = vmatprep.subr.mxu0 0.0
      %447 = vmatpush1.msra.mxu0 0.0
      %448 = vmatprep.subr.mxu0 0.0
      %449 = vmatpush1.msra.mxu0 0.0
      %450 = vmatprep.subr.mxu0 0.0
      %451 = vmatpush1.msra.mxu0 0.0
      %452 = vmatprep.subr.mxu0 0.0
      %453 = vmatpush1.msra.mxu0 0.0
      %454 = vmatprep.subr.mxu0 0.0
      %455 = vmatpush1.msra.mxu0 0.0
      %456 = vmatprep.subr.mxu0 0.0
      %457 = vmatpush1.msra.mxu0 0.0
      %458 = vmatprep.subr.mxu0 0.0
      %459 = vmatpush1.msra.mxu0 0.0
      %460 = vmatprep.subr.mxu0 0.0
      %461 = vmatpush1.msra.mxu0 0.0
      %462 = vmatprep.subr.mxu0 0.0
      %463 = vmatpush1.msra.mxu0 0.0
      %464 = vmatprep.subr.mxu0 0.0
      %465 = vmatpush1.msra.mxu0 0.0
      %466 = vmatprep.subr.mxu0 0.0
      %467 = vmatpush1.msra.mxu0 0.0
      %468 = vmatprep.subr.mxu0 0.0
      %469 = vmatpush1.msra.mxu0 0.0
      %470 = vmatprep.subr.mxu0 0.0
      %471 = vmatpush1.msra.mxu0 0.0
      %472 = vmatprep.mubr.f32.mxu0 0.0
      %473 = vmatmul.mubr.f32.gmra.mrb[0].mxu0 %v406
      %v474 = vpop.f32.mrb[0].mxu0
      %v475 = vadd.f32 0.0, %v474
      %v476 = vpop.f32.mrb[0].mxu0
      %477 = vdwg.mxu0
      %v478 = vadd.f32 %v391, %v475
      %479 = vst [vmem:[%s217] sm:$0xff] %v478
      %v480 = vrot.slane %v478, 4
      %v481 = vadd.f32 %v478, %v480
      %v482 = vrot.slane %v481, 2
      %v483 = vadd.f32 %v481, %v482
      %v484 = vrot.slane %v483, 1
      %v485 = vadd.f32 %v483, %v484
      %486 = vst [vmem:[%s225] sm:$0x1] %v485
      %v487 = vmul.f32 %v478, %v478
      %v488 = vrot.slane %v487, 4
      %v489 = vadd.f32 %v487, %v488
      %v490 = vrot.slane %v489, 2
      %v491 = vadd.f32 %v489, %v490
      %v492 = vrot.slane %v491, 1
      %v493 = vadd.f32 %v491, %v492
      %494 = vst [vmem:[%s225 + $0x1] sm:$0x1] %v493
      %p495 = scmp.lt.s32.totalorder %s19, 1
      %s496 = scalar_select %p495, %s19, 1
      %p497 = scmp.lt.s32.totalorder %s20, 1
      %s498 = scalar_select %p497, %s20, 1
      %s499 = smul.addr %s496, 2
      %s500 = sadd.s32 %s498, %s499
      %s501 = smul.addr %s500, 8
      %s502 = scalar_lea.vmem %s2, %s501
      %p503 = scmp.lt.s32.totalorder %s19, 1
      %s504 = scalar_select %p503, %s19, 1
      %p505 = scmp.lt.s32.totalorder %s20, 1
      %s506 = scalar_select %p505, %s20, 1
      %s507 = smul.addr %s504, 2
      %s508 = sadd.s32 %s506, %s507
      %s509 = smul.addr %s508, 2
      %s510 = scalar_lea.vmem %s3, %s509
      // Predicated region
      $region29: #{conv_block_forward.2} parent=27 // pred_check
        %p511 = pneg %p96
      $region30: #{conv_block_forward.2} parent=27 // pred_check_branch
        %513 = sbr.rel (%p511) target = $region32
      $region31: #{conv_block_forward.2} parent=27 // pred_region
        _
      $region32: #{conv_block_forward.2} parent=27 // pred_fallthru
        _
      // Predicated region
      $region33: #{conv_block_forward.2} parent=27 // pred_check
        %p514 = pneg %p124
      $region34: #{conv_block_forward.2} parent=27 // pred_check_branch
        %516 = sbr.rel (%p514) target = $region36
      $region35: #{conv_block_forward.2} parent=27 // pred_region
        _
      $region36: #{conv_block_forward.2} parent=27 // pred_fallthru
        _
    $region28: #{conv_block_forward.2} parent=5 // pred_fallthru
      _
    %p517 = scmp.le.s32.totalorder 2, %s10
    // Predicated region
    $region37: #{conv_block_forward.2} parent=5 // pred_check
      %p518 = pneg %p517
    $region38: #{conv_block_forward.2} parent=5 // pred_check_branch
      %520 = sbr.rel (%p518) target = $region40
    $region39: #{conv_block_forward.2} parent=5 // pred_region
      %s521 = ssub.s32 %s10, 2
      // Predicated region
      $region41: #{conv_block_forward.2} parent=39 // pred_check
        %p522 = pneg %p102
      $region42: #{conv_block_forward.2} parent=39 // pred_check_branch
        %524 = sbr.rel (%p522) target = $region44
      $region43: #{conv_block_forward.2} parent=39 // pred_region
        %p525 = scmp.lt.s32.totalorder %s21, 1
        %s526 = scalar_select %p525, %s21, 1
        %p527 = scmp.lt.s32.totalorder %s22, 1
        %s528 = scalar_select %p527, %s22, 1
        %s529 = smul.addr %s526, 2
        %s530 = sadd.s32 %s528, %s529
        %s531 = smul.addr %s530, 8
        %s532 = scalar_lea.vmem %s2, %s531
      $region44: #{conv_block_forward.2} parent=39 // pred_fallthru
        _
      // Predicated region
      $region45: #{conv_block_forward.2} parent=39 // pred_check
        %p533 = pneg %p130
      $region46: #{conv_block_forward.2} parent=39 // pred_check_branch
        %535 = sbr.rel (%p533) target = $region48
      $region47: #{conv_block_forward.2} parent=39 // pred_region
        %p536 = scmp.lt.s32.totalorder %s21, 1
        %s537 = scalar_select %p536, %s21, 1
        %p538 = scmp.lt.s32.totalorder %s22, 1
        %s539 = scalar_select %p538, %s22, 1
        %s540 = smul.addr %s537, 2
        %s541 = sadd.s32 %s539, %s540
        %s542 = smul.addr %s541, 2
        %s543 = scalar_lea.vmem %s3, %s542
      $region48: #{conv_block_forward.2} parent=39 // pred_fallthru
        _
    $region40: #{conv_block_forward.2} parent=5 // pred_fallthru
      _
  $region6: #{conv_block_forward.2} parent=0 // loop_footer
    %s14 = sadd.s32 1, %s10
  $region7: #{conv_block_forward.2} parent=0 // loop_footer_branch
    %9 = sbr.rel target = $region3
  $region8: #{conv_block_forward.2} parent=0 // loop_exit
    _

</llo_original>
